<compile_context>
chip_gen: v7x
topology: tpu7x:2x2x1
jax: 0.10.0
libtpu: 0.0.40
codegen_flags: <defaults>
</compile_context>

<pallas_src>
import jax
import jax.numpy as jnp
from jax import lax
from jax.experimental import pallas as pl
from jax.experimental.pallas import tpu as pltpu


# ----------------------------------------------------------------- helpers
def _round_up(x, m):
    return ((x + m - 1) // m) * m


def _pick_divisor(n, candidates):
    """Largest candidate that divides n (falls back to n itself)."""
    for c in candidates:
        if c <= n and n % c == 0:
            return c
    return n


def _vmem_limit_bytes():
    """~75% of physical VMEM, capped; safe fallback if the query is missing."""
    try:
        phys = pltpu.get_tpu_info().vmem_capacity_bytes
    except Exception:
        return 32 * 1024 * 1024
    return int(max(32 * 1024 * 1024, min(3 * phys // 4, 96 * 1024 * 1024)))


# ----------------------------------------------------------------- kernels
def _make_fused_kernel(batch, pixels, eps):
    """Single-block kernel: DGI matmul + exact BN (two-pass var) + apply."""
    inv_n = 1.0 / float(batch * pixels)

    def kernel(params_ref, a_ref, b_ref, out_ref):
        dgi = jnp.dot(a_ref[...], b_ref[...],
                      preferred_element_type=jnp.float32)        # (Bp, Pp) f32
        bp, pp = dgi.shape
        rows = lax.broadcasted_iota(jnp.int32, (bp, pp), 0)
        cols = lax.broadcasted_iota(jnp.int32, (bp, pp), 1)
        valid = jnp.logical_and(rows < batch, cols < pixels)
        # Padded DGI entries are exactly zero, so the plain sum is exact.
        mu = jnp.sum(jnp.sum(dgi, axis=1, keepdims=True),
                     axis=0, keepdims=True) * inv_n              # (1, 1)
        diff = jnp.where(valid, dgi - mu, 0.0)
        var = jnp.sum(jnp.sum(diff * diff, axis=1, keepdims=True),
                      axis=0, keepdims=True) * inv_n             # (1, 1)
        scale = params_ref[0] * lax.rsqrt(var + eps)             # w / sqrt(.)
        shift = params_ref[1] - mu * scale                       # b - mu*scale
        out_ref[...] = dgi * scale + shift

    return kernel


def _dgi_stats_kernel(a_ref, b_ref, o_ref, sum_ref, sq_ref):
    """One (bm, bn) DGI tile, K innermost; BN partials fused into the epilogue."""
    j = pl.program_id(1)
    k = pl.program_id(2)

    @pl.when(k == 0)
    def _init_out():
        o_ref[...] = jnp.zeros_like(o_ref)

    @pl.when(jnp.logical_and(j == 0, k == 0))
    def _init_stats():
        sum_ref[...] = jnp.zeros_like(sum_ref)
        sq_ref[...] = jnp.zeros_like(sq_ref)

    # Accumulate directly into the resident f32 output block (no scratch).
    o_ref[...] += jnp.dot(a_ref[...], b_ref[...],
                          preferred_element_type=jnp.float32)

    @pl.when(k == pl.num_programs(2) - 1)
    def _stats():
        x = o_ref[...]
        sum_ref[...] += x
        sq_ref[...] += x * x


def _bn_apply_kernel(scalars_ref, dgi_ref, out_ref):
    """out = dgi * scale + shift with the two folded BN scalars in SMEM."""
    out_ref[...] = dgi_ref[...] * scalars_ref[0] + scalars_ref[1]


# ----------------------------------------------------------------- wrapper
def encoder_layer_forward(x, pattern, batch_size, numpattern, px,
                          bn_weight, bn_bias, *, eps=1e-5, force_tiled=False):
    """JAX/Pallas equivalent of EncoderLayer.forward(x, pattern, B, N, px)."""
    B, N, px = int(batch_size), int(numpattern), int(px)
    P = px * px
    vmem_limit = _vmem_limit_bytes()

    bucket = jnp.reshape(x, (B, N)).astype(jnp.float32)
    pat = jnp.reshape(pattern, (N, P)).astype(jnp.float32)

    # ---- pattern-only preprocessing (hoisted; O(N*P) once, in XLA) --------
    ave_pattern = jnp.mean(pat, axis=0, keepdims=True)            # (1, P)
    cf_pattern = pat - ave_pattern                                # (N, P)
    comput2 = jnp.sum(pat, axis=1)                                # (N,)
    mean_sum_pattern = jnp.mean(comput2)                          # scalar

    # ---- rank-1 bucket correction folded into the (B, N) LHS --------------
    ave_bucket = jnp.mean(bucket, axis=1, keepdims=True) * 0.5    # (B, 1)
    # Unguarded division to match torch (inf/NaN if the pattern sums to 0).
    gamma = ave_bucket / mean_sum_pattern                         # (B, 1)
    cf_bucket = bucket - gamma * comput2[None, :]                 # (B, N)

    w = jnp.reshape(bn_weight, (-1,))[0].astype(jnp.float32)
    b0 = jnp.reshape(bn_bias, (-1,))[0].astype(jnp.float32)

    Pp = _round_up(P, 128)      # lane-dense padded pixel dim
    Kp = _round_up(N, 8)        # contraction dim: f32 sublane tile only
    Bpf = _round_up(B, 8)

    fused_bytes = 4 * (2 * (Bpf * Kp + Kp * Pp) + 5 * Bpf * Pp)
    use_fused = (not force_tiled) and fused_bytes <= vmem_limit // 2

    if use_fused:
        # -------- single call: matmul + BN stats + apply, DGI never in HBM --
        a = jnp.pad(cf_bucket, ((0, Bpf - B), (0, Kp - N)))
        b = jnp.pad(cf_pattern, ((0, Kp - N), (0, Pp - P)))
        params = jnp.stack([w, b0])
        out_pad = pl.pallas_call(
            _make_fused_kernel(B, P, float(eps)),
            out_shape=jax.ShapeDtypeStruct((Bpf, Pp), jnp.float32),
            grid=(1,),
            in_specs=[pl.BlockSpec(memory_space=pltpu.MemorySpace.SMEM),
                      pl.BlockSpec((Bpf, Kp), lambda i: (0, 0)),
                      pl.BlockSpec((Kp, Pp), lambda i: (0, 0))],
            out_specs=pl.BlockSpec((Bpf, Pp), lambda i: (0, 0)),
            compiler_params=pltpu.CompilerParams(
                dimension_semantics=("arbitrary",),
                vmem_limit_bytes=vmem_limit),
            cost_estimate=pl.CostEstimate(
                flops=2 * Bpf * Kp * Pp + 6 * Bpf * Pp,
                transcendentals=1,
                bytes_accessed=4 * (Bpf * Kp + Kp * Pp + Bpf * Pp)),
        )(params, a, b)
        out = out_pad[:B, :P]   # tiny crop; padded region never left VMEM-size
    else:
        # -------- pass 1: tiled MXU matmul with fused BN-stat epilogue ------
        tile_m = 256 if B >= 256 else _round_up(B, 8)
        Bp = _round_up(B, tile_m)
        tile_n = _pick_divisor(Pp, (512, 256, 128))
        if Kp > 1024:
            Kp = _round_up(N, 128)
            tile_k = _pick_divisor(Kp, (512, 256, 128))
        else:
            tile_k = Kp             # single K step; full-dim block is legal
        grid_m, grid_n, grid_k = Bp // tile_m, Pp // tile_n, Kp // tile_k

        a = jnp.pad(cf_bucket, ((0, Bp - B), (0, Kp - N)))
        b = jnp.pad(cf_pattern, ((0, Kp - N), (0, Pp - P)))

        dgi, sums, sqs = pl.pallas_call(
            _dgi_stats_kernel,
            out_shape=(
                jax.ShapeDtypeStruct((Bp, Pp), jnp.float32),
                jax.ShapeDtypeStruct((grid_m * tile_m, tile_n), jnp.float32),
                jax.ShapeDtypeStruct((grid_m * tile_m, tile_n), jnp.float32)),
            grid=(grid_m, grid_n, grid_k),
            in_specs=[pl.BlockSpec((tile_m, tile_k), lambda i, j, k: (i, k)),
                      pl.BlockSpec((tile_k, tile_n), lambda i, j, k: (k, j))],
            out_specs=(pl.BlockSpec((tile_m, tile_n), lambda i, j, k: (i, j)),
                       pl.BlockSpec((tile_m, tile_n), lambda i, j, k: (i, 0)),
                       pl.BlockSpec((tile_m, tile_n), lambda i, j, k: (i, 0))),
            compiler_params=pltpu.CompilerParams(
                dimension_semantics=("parallel", "arbitrary", "arbitrary"),
                vmem_limit_bytes=vmem_limit),
            cost_estimate=pl.CostEstimate(
                flops=2 * Bp * Kp * Pp + 3 * Bp * Pp,
                transcendentals=0,
                bytes_accessed=4 * (Bp * Kp + Kp * Pp + Bp * Pp
                                    + 2 * grid_m * tile_m * tile_n)),
        )(a, b)

        # -------- BN scalars (padded DGI entries are exactly zero) ----------
        count = jnp.float32(B * P)
        total = jnp.sum(sums)
        total_sq = jnp.sum(sqs)
        mu = total / count
        # TODO(synk): E[x^2]-mu^2 can cancel when |mu| >> std; the fused path
        # uses an exact two-pass variance instead.
        var = jnp.maximum(total_sq / count - mu * mu, 0.0)
        scale = w * lax.rsqrt(var + eps)
        shift = b0 - mu * scale
        scalars = jnp.stack([scale, shift])

        # -------- pass 2: BN apply, lane-dense tiles, unpadded output -------
        am = _pick_divisor(Bp, (256, 128))
        an = _pick_divisor(Pp, (2048, 1024, 512, 256, 128))
        out = pl.pallas_call(
            _bn_apply_kernel,
            out_shape=jax.ShapeDtypeStruct((B, P), jnp.float32),
            grid=(pl.cdiv(B, am), pl.cdiv(P, an)),
            in_specs=[pl.BlockSpec(memory_space=pltpu.MemorySpace.SMEM),
                      pl.BlockSpec((am, an), lambda i, j: (i, j))],
            out_specs=pl.BlockSpec((am, an), lambda i, j: (i, j)),
            compiler_params=pltpu.CompilerParams(
                dimension_semantics=("parallel", "parallel"),
                vmem_limit_bytes=vmem_limit),
            cost_estimate=pl.CostEstimate(
                flops=2 * B * P, transcendentals=0,
                bytes_accessed=4 * (Bp * Pp + B * P)),
        )(scalars, dgi)

    # NCHW output: same as torch.reshape(DGI, (B, 1, px, px)) followed by BN.
    return jnp.reshape(out, (B, 1, px, px))


# ----------------------------------------------------------------- reference
def _reference(x, pattern, batch_size, numpattern, px, bn_weight, bn_bias,
               eps=1e-5):
    """Pure-JAX mirror of the torch module (train-mode BatchNorm2d)."""
    B, N, px = int(batch_size), int(numpattern), int(px)
    P = px * px
    bucket = jnp.reshape(x, (B, N)).astype(jnp.float32)
    pat = jnp.reshape(pattern, (N, P)).astype(jnp.float32)
    ave_pattern = jnp.mean(pat, axis=0)
    cf_pattern = pat - ave_pattern
    comput2 = jnp.sum(pat, axis=1)
    mean_sum_pattern = jnp.mean(comput2)
    ave_bucket = jnp.mean(bucket, axis=1, keepdims=True) * 0.5
    gamma = ave_bucket / mean_sum_pattern
    cf_bucket = bucket - gamma * comput2[None, :]
    dgi = jnp.dot(cf_bucket, cf_pattern, precision=lax.Precision.HIGHEST)
    dgi = jnp.reshape(dgi, (B, 1, px, px))
    mu = jnp.mean(dgi)
    var = jnp.mean((dgi - mu) ** 2)
    w = jnp.reshape(bn_weight, (-1,))[0]
    b0 = jnp.reshape(bn_bias, (-1,))[0]
    return (dgi - mu) * (w / jnp.sqrt(var + eps)) + b0


# ----------------------------------------------------------------- demo
if __name__ == "__main__":
    key = jax.random.PRNGKey(0)
    k1, k2, k3, k4 = jax.random.split(key, 4)

    bn_weight = jnp.ones((1,), jnp.float32)   # BatchNorm2d(1) default init
    bn_bias = jnp.zeros((1,), jnp.float32)

    fwd = jax.jit(encoder_layer_forward, static_argnums=(2, 3, 4),
                  static_argnames=("eps", "force_tiled"))

    # --- case 1: demo shape -> fused single-call path -----------------------
    B1, N1, px1 = 2, 8, 16
    x1 = jax.random.normal(k1, (B1, N1), dtype=jnp.float32)
    pat1 = jax.random.uniform(k2, (N1, px1, px1), dtype=jnp.float32)
    out1 = fwd(x1, pat1, B1, N1, px1, bn_weight, bn_bias)
    jax.block_until_ready(out1)
    assert out1.shape == (B1, 1, px1, px1)
    ref1 = _reference(x1, pat1, B1, N1, px1, bn_weight, bn_bias)
    assert bool(jnp.allclose(out1, ref1, rtol=2e-2, atol=2e-2)), \
        "fused path mismatch vs reference"

    # --- case 2: larger shape forced down the tiled two-pass path -----------
    B2, N2, px2 = 600, 1500, 32
    x2 = jax.random.normal(k3, (B2, N2), dtype=jnp.float32)
    pat2 = jax.random.uniform(k4, (N2, px2, px2), dtype=jnp.float32)
    out2 = fwd(x2, pat2, B2, N2, px2, bn_weight, bn_bias, force_tiled=True)
    jax.block_until_ready(out2)
    assert out2.shape == (B2, 1, px2, px2)
    ref2 = _reference(x2, pat2, B2, N2, px2, bn_weight, bn_bias)
    assert bool(jnp.allclose(out2, ref2, rtol=2e-2, atol=2e-2)), \
        "tiled path mismatch vs reference"

    print("KERNEL_OK")
</pallas_src>

<mosaic_0001>
module attributes {stable_mosaic.version = 11 : i64} {
  func.func @kernel(%arg0: i32, %arg1: memref<2xf32, #tpu.memory_space<smem>>, %arg2: memref<8x8xf32, #tpu.memory_space<vmem>>, %arg3: memref<8x256xf32, #tpu.memory_space<vmem>>, %arg4: memref<8x256xf32, #tpu.memory_space<vmem>>) attributes {dimension_semantics = [#tpu.dimension_semantics<arbitrary>], iteration_bounds = array<i64: 1>, scalar_prefetch = 0 : i64, scratch_operands = 0 : i64, tpu.core_type = #tpu.core_type<tc>, window_params = [{transform_indices = @transform_0, window_bounds = array<i64: 2>}, {pipeline_mode = #tpu.pipeline_mode<synchronous>, transform_indices = @transform_1, window_bounds = array<i64: 8, 8>}, {pipeline_mode = #tpu.pipeline_mode<synchronous>, transform_indices = @transform_2, window_bounds = array<i64: 8, 256>}, {pipeline_mode = #tpu.pipeline_mode<synchronous>, transform_indices = @transform_3, window_bounds = array<i64: 8, 256>}]} {
    %c0 = arith.constant 0 : index
    %c0_0 = arith.constant 0 : index
    %0 = vector.load %arg2[%c0, %c0_0] : memref<8x8xf32, #tpu.memory_space<vmem>>, vector<8x8xf32>
    %c0_1 = arith.constant 0 : index
    %c0_2 = arith.constant 0 : index
    %1 = vector.load %arg3[%c0_1, %c0_2] : memref<8x256xf32, #tpu.memory_space<vmem>>, vector<8x256xf32>
    %cst = arith.constant dense<0.000000e+00> : vector<8x256xf32>
    %2 = tpu.matmul %0, %1, %cst {dimension_numbers = #tpu.dot_dimension_numbers<[1], [0], [0], [1], [0, 0, 1, 1], [], []>} : vector<8x8xf32>, vector<8x256xf32>, vector<8x256xf32> -> vector<8x256xf32>
    %3 = tpu.iota {dimensions = array<i32: 0>} : vector<8x256xi32>
    %4 = tpu.iota {dimensions = array<i32: 1>} : vector<8x256xi32>
    %c2_i32 = arith.constant 2 : i32
    %5 = vector.broadcast %c2_i32 : i32 to vector<8x256xi32>
    %6 = arith.cmpi slt, %3, %5 : vector<8x256xi32>
    %c256_i32 = arith.constant 256 : i32
    %7 = vector.broadcast %c256_i32 : i32 to vector<8x256xi32>
    %8 = arith.cmpi slt, %4, %7 : vector<8x256xi32>
    %9 = arith.andi %6, %8 : vector<8x256xi1>
    %cst_3 = arith.constant dense<0.000000e+00> : vector<8xf32>
    %10 = vector.multi_reduction <add>, %2, %cst_3 [1] : vector<8x256xf32> to vector<8xf32>
    %11 = vector.shape_cast %10 : vector<8xf32> to vector<8x1xf32>
    %cst_4 = arith.constant dense<0.000000e+00> : vector<1xf32>
    %12 = vector.multi_reduction <add>, %11, %cst_4 [0] : vector<8x1xf32> to vector<1xf32>
    %13 = vector.shape_cast %12 : vector<1xf32> to vector<1x1xf32>
    %cst_5 = arith.constant 0.001953125 : f32
    %14 = vector.broadcast %cst_5 : f32 to vector<1x1xf32>
    %15 = arith.mulf %13, %14 : vector<1x1xf32>
    %16 = vector.broadcast %15 : vector<1x1xf32> to vector<8x256xf32>
    %17 = arith.subf %2, %16 : vector<8x256xf32>
    %cst_6 = arith.constant 0.000000e+00 : f32
    %18 = vector.broadcast %cst_6 : f32 to vector<8x256xf32>
    %19 = arith.select %9, %17, %18 : vector<8x256xi1>, vector<8x256xf32>
    %20 = arith.mulf %19, %19 : vector<8x256xf32>
    %cst_7 = arith.constant dense<0.000000e+00> : vector<8xf32>
    %21 = vector.multi_reduction <add>, %20, %cst_7 [1] : vector<8x256xf32> to vector<8xf32>
    %22 = vector.shape_cast %21 : vector<8xf32> to vector<8x1xf32>
    %cst_8 = arith.constant dense<0.000000e+00> : vector<1xf32>
    %23 = vector.multi_reduction <add>, %22, %cst_8 [0] : vector<8x1xf32> to vector<1xf32>
    %24 = vector.shape_cast %23 : vector<1xf32> to vector<1x1xf32>
    %cst_9 = arith.constant 0.001953125 : f32
    %25 = vector.broadcast %cst_9 : f32 to vector<1x1xf32>
    %26 = arith.mulf %24, %25 : vector<1x1xf32>
    %c0_10 = arith.constant 0 : index
    %27 = memref.load %arg1[%c0_10] : memref<2xf32, #tpu.memory_space<smem>>
    %cst_11 = arith.constant 9.99999974E-6 : f32
    %28 = vector.broadcast %cst_11 : f32 to vector<1x1xf32>
    %29 = arith.addf %26, %28 : vector<1x1xf32>
    %30 = math.rsqrt %29 : vector<1x1xf32>
    %31 = vector.broadcast %27 : f32 to vector<1x1xf32>
    %32 = arith.mulf %31, %30 : vector<1x1xf32>
    %c1 = arith.constant 1 : index
    %33 = memref.load %arg1[%c1] : memref<2xf32, #tpu.memory_space<smem>>
    %34 = arith.mulf %15, %32 : vector<1x1xf32>
    %35 = vector.broadcast %33 : f32 to vector<1x1xf32>
    %36 = arith.subf %35, %34 : vector<1x1xf32>
    %37 = vector.broadcast %32 : vector<1x1xf32> to vector<8x256xf32>
    %38 = arith.mulf %2, %37 : vector<8x256xf32>
    %39 = vector.broadcast %36 : vector<1x1xf32> to vector<8x256xf32>
    %40 = arith.addf %38, %39 : vector<8x256xf32>
    %c0_12 = arith.constant 0 : index
    %c0_13 = arith.constant 0 : index
    %41 = vector.load %arg4[%c0_12, %c0_13] : memref<8x256xf32, #tpu.memory_space<vmem>>, vector<8x256xf32>
    tpu.vector_store %arg4[%c0_12, %c0_13], %40 {strides = array<i32>} : memref<8x256xf32, #tpu.memory_space<vmem>>, vector<8x256xf32>,
    return
  }
  func.func @transform_0(%arg0: i32) -> i32 {
    %c0_i32 = arith.constant 0 : i32
    %c0_i32_0 = arith.constant 0 : i32
    return %c0_i32 : i32
  }
  func.func @transform_1(%arg0: i32) -> (i32, i32) {
    %c0_i32 = arith.constant 0 : i32
    %c0_i32_0 = arith.constant 0 : i32
    %c0_i32_1 = arith.constant 0 : i32
    return %c0_i32, %c0_i32_0 : i32, i32
  }
  func.func @transform_2(%arg0: i32) -> (i32, i32) {
    %c0_i32 = arith.constant 0 : i32
    %c0_i32_0 = arith.constant 0 : i32
    %c0_i32_1 = arith.constant 0 : i32
    return %c0_i32, %c0_i32_0 : i32, i32
  }
  func.func @transform_3(%arg0: i32) -> (i32, i32) {
    %c0_i32 = arith.constant 0 : i32
    %c0_i32_0 = arith.constant 0 : i32
    %c0_i32_1 = arith.constant 0 : i32
    return %c0_i32, %c0_i32_0 : i32, i32
  }
}

</mosaic_0001>

<llo_original>
// kernel: encoder_layer_forward.1
$region0: #{encoder_layer_forward.1}
  #allocation0 [shape = 'u32[]', space=smem, size = 0x4, offset = 0x4, fixed_abs, tag = 'smem constant byte address 0x4 - core index']
  #allocation1 [shape = 'u32[144,128]{1,0:T(1,128)}', space=vmem, size = 0x12000, scoped, tag = 'internal scratch']
  %s0 = inlined_call_operand.vmem [shape: f32[2], index: 0, kind: input, shape index: {}]
  %s1 = inlined_call_operand.vmem [shape: f32[8,8], index: 1, kind: input, shape index: {}]
  %s2 = inlined_call_operand.vmem [shape: f32[8,256], index: 2, kind: input, shape index: {}]
  %s3 = inlined_call_operand.vmem [shape: f32[8,256], index: 3, kind: output, shape index: {}]
  %s4 = sld [smem:[#allocation0]]
  $region26: #{encoder_layer_forward.1} parent=0
    _
  %s6 = ssub.s32 1, %s4
  %s7 = scalar_select 0, %s6, %s4
  $region1: #{encoder_layer_forward.1} parent=0
    #allocation2 [shape = 'u8[512]{0}', space=smem, size = 0x200, scoped, tag = 'input window, operand 0, single buffered']
    #allocation3 [shape = 's32[1]{0}', space=sflag, size = 0x4, scoped, tag = 'scoped memory for encoder_layer_forward.1']
    %8 = vsyncpa [#allocation3], 0
    // Predicated region
    $region2: #{encoder_layer_forward.1} parent=1 // pred_check
      _
    $region3: #{encoder_layer_forward.1} parent=1 // pred_check_branch
      %10 = sbr.rel (0) target = $region5
    $region4: #{encoder_layer_forward.1} parent=1 // pred_region
      %s12 = ssub.s32 16, 16
      %13 = vsyncadd [#allocation3], %s12
      %s15 = sshll.u32 %s0, 4
      %s16 = int_to_ptr.vmem [resolvable:$true] %s15
      %18 = dma.vmem_to_smem %s16, 16, [#allocation2], [#allocation3]
    $region5: #{encoder_layer_forward.1} parent=1 // pred_fallthru
      _
    // Predicated region
    $region6: #{encoder_layer_forward.1} parent=1 // pred_check
      _
    $region7: #{encoder_layer_forward.1} parent=1 // pred_check_branch
      %20 = sbr.rel (0) target = $region9
    $region8: #{encoder_layer_forward.1} parent=1 // pred_region
      _
    $region9: #{encoder_layer_forward.1} parent=1 // pred_fallthru
      _
    // Predicated region
    $region10: #{encoder_layer_forward.1} parent=1 // pred_check
      _
    $region11: #{encoder_layer_forward.1} parent=1 // pred_check_branch
      %22 = sbr.rel (0) target = $region13
    $region12: #{encoder_layer_forward.1} parent=1 // pred_region
      _
    $region13: #{encoder_layer_forward.1} parent=1 // pred_fallthru
      _
    // Predicated region
    $region14: #{encoder_layer_forward.1} parent=1 // pred_check
      _
    $region15: #{encoder_layer_forward.1} parent=1 // pred_check_branch
      %24 = sbr.rel (0) target = $region17
    $region16: #{encoder_layer_forward.1} parent=1 // pred_region
      %25 = dma.done [#allocation3], 16
    $region17: #{encoder_layer_forward.1} parent=1 // pred_fallthru
      _
    %26 = sfence
    %v27 = vld [vmem:[%s1] sm:$0xff]
    %v28 = vld [vmem:[%s2] sm:$0xff]
    %v29 = vld [vmem:[%s2 + $0x8] sm:$0xff]
    %vm30 = vcmask 64512
    %v32 = vsel %vm30, %v27, 0
    %34 = vmatprep.subr.mxu0 %v29
    %35 = vmatpush1.msra.mxu0 %v28
    %36 = vmatprep.subr.mxu0 0.0
    %37 = vmatpush1.msra.mxu0 0.0
    %38 = vmatprep.subr.mxu0 0.0
    %39 = vmatpush1.msra.mxu0 0.0
    %40 = vmatprep.subr.mxu0 0.0
    %41 = vmatpush1.msra.mxu0 0.0
    %42 = vmatprep.subr.mxu0 0.0
    %43 = vmatpush1.msra.mxu0 0.0
    %44 = vmatprep.subr.mxu0 0.0
    %45 = vmatpush1.msra.mxu0 0.0
    %46 = vmatprep.subr.mxu0 0.0
    %47 = vmatpush1.msra.mxu0 0.0
    %48 = vmatprep.subr.mxu0 0.0
    %49 = vmatpush1.msra.mxu0 0.0
    %50 = vmatprep.subr.mxu0 0.0
    %51 = vmatpush1.msra.mxu0 0.0
    %52 = vmatprep.subr.mxu0 0.0
    %53 = vmatpush1.msra.mxu0 0.0
    %54 = vmatprep.subr.mxu0 0.0
    %55 = vmatpush1.msra.mxu0 0.0
    %56 = vmatprep.subr.mxu0 0.0
    %57 = vmatpush1.msra.mxu0 0.0
    %58 = vmatprep.subr.mxu0 0.0
    %59 = vmatpush1.msra.mxu0 0.0
    %60 = vmatprep.subr.mxu0 0.0
    %61 = vmatpush1.msra.mxu0 0.0
    %62 = vmatprep.subr.mxu0 0.0
    %63 = vmatpush1.msra.mxu0 0.0
    %64 = vmatprep.subr.mxu0 0.0
    %65 = vmatpush1.msra.mxu0 0.0
    %66 = vmatprep.subr.mxu0 0.0
    %67 = vmatpush1.msra.mxu0 0.0
    %68 = vmatprep.subr.mxu0 0.0
    %69 = vmatpush1.msra.mxu0 0.0
    %70 = vmatprep.subr.mxu0 0.0
    %71 = vmatpush1.msra.mxu0 0.0
    %72 = vmatprep.subr.mxu0 0.0
    %73 = vmatpush1.msra.mxu0 0.0
    %74 = vmatprep.subr.mxu0 0.0
    %75 = vmatpush1.msra.mxu0 0.0
    %76 = vmatprep.subr.mxu0 0.0
    %77 = vmatpush1.msra.mxu0 0.0
    %78 = vmatprep.subr.mxu0 0.0
    %79 = vmatpush1.msra.mxu0 0.0
    %80 = vmatprep.subr.mxu0 0.0
    %81 = vmatpush1.msra.mxu0 0.0
    %82 = vmatprep.subr.mxu0 0.0
    %83 = vmatpush1.msra.mxu0 0.0
    %84 = vmatprep.subr.mxu0 0.0
    %85 = vmatpush1.msra.mxu0 0.0
    %86 = vmatprep.subr.mxu0 0.0
    %87 = vmatpush1.msra.mxu0 0.0
    %88 = vmatprep.subr.mxu0 0.0
    %89 = vmatpush1.msra.mxu0 0.0
    %90 = vmatprep.subr.mxu0 0.0
    %91 = vmatpush1.msra.mxu0 0.0
    %92 = vmatprep.subr.mxu0 0.0
    %93 = vmatpush1.msra.mxu0 0.0
    %94 = vmatprep.subr.mxu0 0.0
    %95 = vmatpush1.msra.mxu0 0.0
    %96 = vmatprep.subr.mxu0 0.0
    %97 = vmatpush1.msra.mxu0 0.0
    %98 = vmatprep.mubr.f32.mxu0 0.0
    %99 = vmatmul.mubr.f32.gmra.mrb[0].mxu0 %v32
    %v100 = vpop.f32.mrb[0].mxu0
    %v101 = vadd.f32 0.0, %v100
    %v102 = vpop.f32.mrb[0].mxu0
    %v103 = vadd.f32 0.0, %v102
    %104 = vdwg.mxu0
    %v105 = vlaneseq
    %v106 = vshrl.u32 %v105, 7
    %v107 = vlaneseq
    %v108 = vand.u32 %v107, 127
    %v109 = vadd.s32 %v108, 128
    %vm110 = vcmp.lt.s32.totalorder %v106, 2
    %vm111 = vcmp.lt.s32.totalorder %v108, 256
    %vm112 = vcmp.lt.s32.totalorder %v109, 256
    %vm113 = vmand %vm110, %vm111
    %vm114 = vmand %vm110, %vm112
    %v115 = vadd.f32 %v101, %v103
    %116 = vadd.xlane.f32.xlu0 %v115
    %v117 = vpop.xlane.xlu0 %116
    %v118 = vrot.slane %v117, 4
    %v119 = vadd.f32 %v117, %v118
    %v120 = vrot.slane %v119, 2
    %v121 = vadd.f32 %v119, %v120
    %v122 = vrot.slane %v121, 1
    %v123 = vadd.f32 %v121, %v122
    %v124 = vmul.f32 %v123, 0.001953125
    %v125 = vsub.f32 %v101, %v124
    %v126 = vsub.f32 %v103, %v124
    %v127 = vsel %vm113, %v125, 0.0
    %v128 = vsel %vm114, %v126, 0.0
    %v129 = vmul.f32 %v127, %v127
    %v130 = vmul.f32 %v128, %v128
    %v131 = vadd.f32 %v129, %v130
    %132 = vadd.xlane.f32.xlu0 %v131
    %v133 = vpop.xlane.xlu0 %132
    %v134 = vrot.slane %v133, 4
    %v135 = vadd.f32 %v133, %v134
    %v136 = vrot.slane %v135, 2
    %v137 = vadd.f32 %v135, %v136
    %v138 = vrot.slane %v137, 1
    %v139 = vadd.f32 %v137, %v138
    %v140 = vmul.f32 %v139, 0.001953125
    %s141 = sld [smem:[#allocation2]]
    %v142 = vadd.f32 %v140, 1e-05
    %v143 = vrsqrt.pop %v142
    %v144 = vstv %s141
    %v145 = vmul.f32 %v144, %v143
    %s146 = sld [smem:[#allocation2 + $0x1]]
    %v147 = vmul.f32 %v124, %v145
    %v148 = vstv %s146
    %v149 = vsub.f32 %v148, %v147
    %v150 = vmul.f32 %v101, %v145
    %v151 = vmul.f32 %v103, %v145
    %v152 = vadd.f32 %v150, %v149
    %v153 = vadd.f32 %v151, %v149
    %154 = vst [vmem:[%s3] sm:$0xff] %v152
    %155 = vst [vmem:[%s3 + $0x8] sm:$0xff] %v153
    // Predicated region
    $region18: #{encoder_layer_forward.1} parent=1 // pred_check
      _
    $region19: #{encoder_layer_forward.1} parent=1 // pred_check_branch
      %157 = sbr.rel (0) target = $region21
    $region20: #{encoder_layer_forward.1} parent=1 // pred_region
      _
    $region21: #{encoder_layer_forward.1} parent=1 // pred_fallthru
      _
    // Predicated region
    $region22: #{encoder_layer_forward.1} parent=1 // pred_check
      _
    $region23: #{encoder_layer_forward.1} parent=1 // pred_check_branch
      %159 = sbr.rel (0) target = $region25
    $region24: #{encoder_layer_forward.1} parent=1 // pred_region
      _
    $region25: #{encoder_layer_forward.1} parent=1 // pred_fallthru
      _
    %160 = vsyncpa [#allocation3], 1

</llo_original>
